<compile_context>
chip_gen: v7x
topology: tpu7x:2x2x1
jax: 0.10.0
libtpu: 0.0.40
codegen_flags: <defaults>
</compile_context>

<pallas_src>
import math
import functools
from typing import Any, NamedTuple

import jax
import jax.numpy as jnp
from jax.experimental import pallas as pl
from jax.experimental.pallas import tpu as pltpu


def _round_up(x: int, m: int) -> int:
    return ((x + m - 1) // m) * m


def _pick_block(padded_dim: int, cap: int) -> int:
    """Largest multiple of 128 <= cap that divides padded_dim (padded_dim % 128 == 0)."""
    cap = max(128, (cap // 128) * 128)
    b = min(cap, padded_dim)
    b = (b // 128) * 128
    while padded_dim % b != 0:
        b -= 128
    return b


# --------------------------------------------------------------------------------------
# Kernels
# --------------------------------------------------------------------------------------
def _masked_linear_kernel_f32out(x_ref, w0_ref, um_ref, b_ref, o_ref):
    """f32 output: accumulate directly into the VMEM-resident output block (no scratch)."""
    k = pl.program_id(2)
    w = w0_ref[...] + um_ref[...]                       # effective weight tile, (bk, bn)
    part = jnp.dot(x_ref[...], w, preferred_element_type=jnp.float32)

    @pl.when(k == 0)
    def _():
        o_ref[...] = part                               # no zero-fill + add on the first k

    @pl.when(k > 0)
    def _():
        o_ref[...] += part

    @pl.when(k == pl.num_programs(2) - 1)
    def _():
        o_ref[...] += b_ref[...]


def _masked_linear_kernel_acc(x_ref, w0_ref, um_ref, b_ref, o_ref, acc_ref):
    """Non-f32 output: accumulate in an f32 scratch, cast + store on the last k step."""
    k = pl.program_id(2)
    w = w0_ref[...] + um_ref[...]
    part = jnp.dot(x_ref[...], w, preferred_element_type=jnp.float32)

    @pl.when(k == 0)
    def _():
        acc_ref[...] = part

    @pl.when(k > 0)
    def _():
        acc_ref[...] += part

    @pl.when(k == pl.num_programs(2) - 1)
    def _():
        o_ref[...] = (acc_ref[...] + b_ref[...]).astype(o_ref.dtype)


# --------------------------------------------------------------------------------------
# Jitted 2-D launcher
# --------------------------------------------------------------------------------------
@functools.partial(
    jax.jit,
    static_argnames=("out_features", "block_m", "block_n", "block_k", "out_dtype"))
def _masked_linear_2d(x2d, w0_t, um_t, bias2d, *,
                      out_features, block_m, block_n, block_k, out_dtype):
    B, K_in = x2d.shape
    Kp, Np = w0_t.shape
    Bp = _round_up(B, block_m)

    x_p = x2d
    if (Bp, Kp) != x2d.shape:
        x_p = jnp.pad(x2d, ((0, Bp - B), (0, Kp - K_in)))

    grid = (Bp // block_m, Np // block_n, Kp // block_k)
    m_tiles, n_tiles = grid[0], grid[1]

    w_isz = w0_t.dtype.itemsize
    x_isz = x_p.dtype.itemsize
    o_isz = jnp.dtype(out_dtype).itemsize

    # Grid-aware HBM traffic: weights are re-read once per M tile, x once per N tile.
    cost = pl.CostEstimate(
        flops=2 * Bp * Kp * Np + Kp * Np * m_tiles,
        transcendentals=0,
        bytes_accessed=int(2 * Kp * Np * w_isz * m_tiles
                           + Bp * Kp * x_isz * n_tiles
                           + Bp * Np * o_isz
                           + Np * 4 * m_tiles),
    )

    f32_out = jnp.dtype(out_dtype) == jnp.dtype(jnp.float32)
    kernel = _masked_linear_kernel_f32out if f32_out else _masked_linear_kernel_acc
    scratch = [] if f32_out else [pltpu.VMEM((block_m, block_n), jnp.float32)]

    # VMEM budget from the actual tile footprint (double-buffered inputs + output + scratch),
    # capped conservatively so it is also safe on v7x (64 MiB physical VMEM per TC).
    needed = (2 * (block_m * block_k * x_isz
                   + 2 * block_k * block_n * w_isz
                   + block_n * 4)
              + 2 * block_m * block_n * o_isz
              + (0 if f32_out else block_m * block_n * 4))
    vmem_limit = int(min(max(needed + (4 << 20), 32 << 20), 48 << 20))

    out_p = pl.pallas_call(
        kernel,
        out_shape=jax.ShapeDtypeStruct((Bp, Np), out_dtype),
        grid_spec=pl.GridSpec(
            grid=grid,
            in_specs=[
                pl.BlockSpec((block_m, block_k), lambda i, j, k: (i, k)),  # x tile
                pl.BlockSpec((block_k, block_n), lambda i, j, k: (k, j)),  # weight_0.T tile
                pl.BlockSpec((block_k, block_n), lambda i, j, k: (k, j)),  # (U*mask).T tile
                pl.BlockSpec((1, block_n), lambda i, j, k: (0, j)),        # bias tile
            ],
            out_specs=pl.BlockSpec((block_m, block_n), lambda i, j, k: (i, j)),
            scratch_shapes=scratch,
        ),
        compiler_params=pltpu.CompilerParams(
            dimension_semantics=("parallel", "parallel", "arbitrary"),
            vmem_limit_bytes=vmem_limit,
        ),
        cost_estimate=cost,
    )(x_p, w0_t, um_t, bias2d)

    return out_p[:B, :out_features]


# --------------------------------------------------------------------------------------
# Parameter preparation (once per layer) + hot-path apply
# --------------------------------------------------------------------------------------
class MaskedLinearParams(NamedTuple):
    w0_t: Any          # (Kp, Np), compute_dtype, pre-transposed + padded
    um_t: Any          # (Kp, Np), compute_dtype, (U*mask).T, pre-folded + padded
    bias2d: Any        # (1, Np), f32
    in_features: int
    out_features: int
    block_n: int
    block_k: int
    compute_dtype: Any


def prepare_masked_linear_params(weight_0, U, mask, bias=None, *,
                                 compute_dtype=None, block_n=None, block_k=None):
    """One-time layout plumbing: fold U*mask, transpose to (K, N), pad, optional bf16 cast."""
    out_features, in_features = weight_0.shape
    assert U.shape == weight_0.shape and mask.shape == weight_0.shape

    if compute_dtype is None:
        compute_dtype = weight_0.dtype
    compute_dtype = jnp.dtype(compute_dtype)

    Np = _round_up(out_features, 128)
    Kp = _round_up(in_features, 128)
    if block_n is None:
        block_n = _pick_block(Np, 512)
    if block_k is None:
        block_k = _pick_block(Kp, 1024)
    assert Np % block_n == 0 and Kp % block_k == 0

    u_masked = U * mask                                     # fold once, outside the kernel

    def prep(a):
        a = a.T                                             # (in, out): out on the lane axis
        pr, pc = Kp - in_features, Np - out_features
        if pr or pc:
            a = jnp.pad(a, ((0, pr), (0, pc)))
        return a.astype(compute_dtype)

    w0_t = prep(weight_0)
    um_t = prep(u_masked)

    if bias is None:
        bias2d = jnp.zeros((1, Np), dtype=jnp.float32)
    else:
        bias2d = bias.reshape(1, out_features).astype(jnp.float32)
        if Np != out_features:
            bias2d = jnp.pad(bias2d, ((0, 0), (0, Np - out_features)))

    return MaskedLinearParams(w0_t, um_t, bias2d, in_features, out_features,
                              block_n, block_k, compute_dtype)


def masked_linear_apply(params: MaskedLinearParams, x):
    """y = x @ (weight_0 + U * mask).T + bias using pre-prepared parameters."""
    assert x.shape[-1] == params.in_features
    lead = x.shape[:-1]
    x2d = x.reshape(-1, params.in_features)
    B = x2d.shape[0]
    out_dtype = jnp.dtype(x.dtype)

    # Single M tile up to 512 rows (no forced split: megacore shards the N axis instead).
    # bf16 x tiles pack two rows per sublane -> align block_m to 16 (else 8).
    gran = 16 if params.compute_dtype == jnp.dtype(jnp.bfloat16) else 8
    if B <= 512:
        block_m = _round_up(max(B, 1), gran)
    else:
        num_m = -(-B // 512)
        block_m = min(512, _round_up(-(-B // num_m), gran))

    x2d = x2d.astype(params.compute_dtype)
    out = _masked_linear_2d(
        x2d, params.w0_t, params.um_t, params.bias2d,
        out_features=params.out_features,
        block_m=block_m, block_n=params.block_n, block_k=params.block_k,
        out_dtype=out_dtype)
    return out.reshape(*lead, params.out_features)


def masked_linear(x, weight_0, U, mask, bias=None, *, compute_dtype=None):
    """One-shot convenience wrapper (preps every call). For repeated forward passes,
    call prepare_masked_linear_params() once and masked_linear_apply() per step."""
    params = prepare_masked_linear_params(weight_0, U, mask, bias, compute_dtype=compute_dtype)
    return masked_linear_apply(params, x)


# --------------------------------------------------------------------------------------
# Deterministic re-implementation of MaskedLinear.reset_parameters()
# --------------------------------------------------------------------------------------
def init_masked_linear_params(key, in_features, out_features, dtype=jnp.float32):
    k_w0, k_b, k_u = jax.random.split(key, 3)
    # kaiming_uniform_(a=sqrt(5)) on (out, in) -> U(-bound, bound), bound = sqrt(1/fan_in)
    bound_w = math.sqrt(1.0 / in_features)
    weight_0 = jax.random.uniform(
        k_w0, (out_features, in_features), dtype=dtype, minval=-bound_w, maxval=bound_w)
    mask = jnp.ones((out_features, in_features), dtype=dtype)       # constant_(mask, 1.0)
    bound_b = 1.0 / math.sqrt(in_features)
    bias = jax.random.uniform(
        k_b, (out_features,), dtype=dtype, minval=-bound_b, maxval=bound_b)
    # reset_parameters() sets U=0; use a nonzero deterministic value so the masked-update
    # path is actually exercised by the kernel test.
    U = 0.01 * jax.random.normal(k_u, (out_features, in_features), dtype=dtype)
    return weight_0, U, mask, bias


if __name__ == "__main__":
    key = jax.random.PRNGKey(0)
    k_x, k_p = jax.random.split(key)

    batch = 8
    in_features = 32
    out_features = 48

    x = jax.random.normal(k_x, (batch, in_features), dtype=jnp.float32)
    weight_0, U, mask, bias = init_masked_linear_params(k_p, in_features, out_features)

    # Pure-JAX reference.
    w_eff = weight_0 + U * mask
    y_ref = x @ w_eff.T + bias

    # Recommended path: prepare once (fold/transpose/pad), apply on the hot path.
    params = prepare_masked_linear_params(weight_0, U, mask, bias)
    y = jax.block_until_ready(masked_linear_apply(params, x))
    assert y.shape == (batch, out_features)
    assert jnp.allclose(y, y_ref, atol=1e-5, rtol=1e-5)

    # One-shot wrapper, no bias, non-tile-multiple batch.
    x2 = jax.random.normal(k_x, (5, in_features), dtype=jnp.float32)
    y2 = jax.block_until_ready(masked_linear(x2, weight_0, U, mask, None))
    assert jnp.allclose(y2, x2 @ w_eff.T, atol=1e-5, rtol=1e-5)

    # Arbitrary leading dims (*, H_in).
    x3 = jax.random.normal(k_x, (2, 3, in_features), dtype=jnp.float32)
    y3 = jax.block_until_ready(masked_linear_apply(params, x3))
    assert jnp.allclose(y3, x3 @ w_eff.T + bias, atol=1e-5, rtol=1e-5)

    # bf16 dot-input path (MXU-native, halves weight HBM bytes); looser tolerance.
    params_bf16 = prepare_masked_linear_params(weight_0, U, mask, bias,
                                               compute_dtype=jnp.bfloat16)
    y_bf16 = jax.block_until_ready(masked_linear_apply(params_bf16, x))
    assert y_bf16.dtype == x.dtype
    assert jnp.allclose(y_bf16, y_ref, atol=5e-2, rtol=5e-2)

    print("KERNEL_OK")
</pallas_src>

<mosaic_0001>
module attributes {stable_mosaic.version = 11 : i64} {
  func.func @_masked_linear_kernel_f32out(%arg0: i32, %arg1: i32, %arg2: i32, %arg3: memref<8x128xf32, #tpu.memory_space<vmem>>, %arg4: memref<128x128xf32, #tpu.memory_space<vmem>>, %arg5: memref<128x128xf32, #tpu.memory_space<vmem>>, %arg6: memref<1x128xf32, #tpu.memory_space<vmem>>, %arg7: memref<8x128xf32, #tpu.memory_space<vmem>>) attributes {dimension_semantics = [#tpu.dimension_semantics<parallel>, #tpu.dimension_semantics<parallel>, #tpu.dimension_semantics<arbitrary>], iteration_bounds = array<i64: 1, 1, 1>, scalar_prefetch = 0 : i64, scratch_operands = 0 : i64, tpu.core_type = #tpu.core_type<tc>, window_params = [{transform_indices = @transform_0, window_bounds = array<i64: 8, 128>}, {transform_indices = @transform_1, window_bounds = array<i64: 128, 128>}, {transform_indices = @transform_2, window_bounds = array<i64: 128, 128>}, {transform_indices = @transform_3, window_bounds = array<i64: 1, 128>}, {transform_indices = @transform_4, window_bounds = array<i64: 8, 128>}]} {
    %c0 = arith.constant 0 : index
    %c0_0 = arith.constant 0 : index
    %0 = vector.load %arg4[%c0, %c0_0] : memref<128x128xf32, #tpu.memory_space<vmem>>, vector<128x128xf32>
    %c0_1 = arith.constant 0 : index
    %c0_2 = arith.constant 0 : index
    %1 = vector.load %arg5[%c0_1, %c0_2] : memref<128x128xf32, #tpu.memory_space<vmem>>, vector<128x128xf32>
    %2 = arith.addf %0, %1 : vector<128x128xf32>
    %c0_3 = arith.constant 0 : index
    %c0_4 = arith.constant 0 : index
    %3 = vector.load %arg3[%c0_3, %c0_4] : memref<8x128xf32, #tpu.memory_space<vmem>>, vector<8x128xf32>
    %cst = arith.constant dense<0.000000e+00> : vector<8x128xf32>
    %4 = tpu.matmul %3, %2, %cst {dimension_numbers = #tpu.dot_dimension_numbers<[1], [0], [0], [1], [0, 0, 1, 1], [], []>} : vector<8x128xf32>, vector<128x128xf32>, vector<8x128xf32> -> vector<8x128xf32>
    %c0_i32 = arith.constant 0 : i32
    %5 = arith.cmpi eq, %arg2, %c0_i32 : i32
    %6 = arith.extui %5 : i1 to i32
    %c0_i32_5 = arith.constant 0 : i32
    %7 = arith.cmpi ne, %6, %c0_i32_5 : i32
    scf.if %7 {
      %c0_10 = arith.constant 0 : index
      %c0_11 = arith.constant 0 : index
      %14 = vector.load %arg7[%c0_10, %c0_11] : memref<8x128xf32, #tpu.memory_space<vmem>>, vector<8x128xf32>
      tpu.vector_store %arg7[%c0_10, %c0_11], %4 {strides = array<i32>} : memref<8x128xf32, #tpu.memory_space<vmem>>, vector<8x128xf32>,
    } else {
    }
    %c0_i32_6 = arith.constant 0 : i32
    %8 = arith.cmpi sgt, %arg2, %c0_i32_6 : i32
    %9 = arith.extui %8 : i1 to i32
    %c0_i32_7 = arith.constant 0 : i32
    %10 = arith.cmpi ne, %9, %c0_i32_7 : i32
    scf.if %10 {
      %c0_10 = arith.constant 0 : index
      %c0_11 = arith.constant 0 : index
      %14 = vector.load %arg7[%c0_10, %c0_11] : memref<8x128xf32, #tpu.memory_space<vmem>>, vector<8x128xf32>
      %15 = arith.addf %14, %4 : vector<8x128xf32>
      %c0_12 = arith.constant 0 : index
      %c0_13 = arith.constant 0 : index
      %16 = vector.load %arg7[%c0_12, %c0_13] : memref<8x128xf32, #tpu.memory_space<vmem>>, vector<8x128xf32>
      tpu.vector_store %arg7[%c0_12, %c0_13], %15 {strides = array<i32>} : memref<8x128xf32, #tpu.memory_space<vmem>>, vector<8x128xf32>,
    } else {
    }
    %c0_i32_8 = arith.constant 0 : i32
    %11 = arith.cmpi eq, %arg2, %c0_i32_8 : i32
    %12 = arith.extui %11 : i1 to i32
    %c0_i32_9 = arith.constant 0 : i32
    %13 = arith.cmpi ne, %12, %c0_i32_9 : i32
    scf.if %13 {
      %c0_10 = arith.constant 0 : index
      %c0_11 = arith.constant 0 : index
      %14 = vector.load %arg7[%c0_10, %c0_11] : memref<8x128xf32, #tpu.memory_space<vmem>>, vector<8x128xf32>
      %c0_12 = arith.constant 0 : index
      %c0_13 = arith.constant 0 : index
      %15 = vector.load %arg6[%c0_12, %c0_13] : memref<1x128xf32, #tpu.memory_space<vmem>>, vector<1x128xf32>
      %16 = vector.broadcast %15 : vector<1x128xf32> to vector<8x128xf32>
      %17 = arith.addf %14, %16 : vector<8x128xf32>
      %c0_14 = arith.constant 0 : index
      %c0_15 = arith.constant 0 : index
      %18 = vector.load %arg7[%c0_14, %c0_15] : memref<8x128xf32, #tpu.memory_space<vmem>>, vector<8x128xf32>
      tpu.vector_store %arg7[%c0_14, %c0_15], %17 {strides = array<i32>} : memref<8x128xf32, #tpu.memory_space<vmem>>, vector<8x128xf32>,
    } else {
    }
    return
  }
  func.func @transform_0(%arg0: i32, %arg1: i32, %arg2: i32) -> (i32, i32) {
    %c0_i32 = arith.constant 0 : i32
    return %arg0, %arg2 : i32, i32
  }
  func.func @transform_1(%arg0: i32, %arg1: i32, %arg2: i32) -> (i32, i32) {
    %c0_i32 = arith.constant 0 : i32
    return %arg2, %arg1 : i32, i32
  }
  func.func @transform_2(%arg0: i32, %arg1: i32, %arg2: i32) -> (i32, i32) {
    %c0_i32 = arith.constant 0 : i32
    return %arg2, %arg1 : i32, i32
  }
  func.func @transform_3(%arg0: i32, %arg1: i32, %arg2: i32) -> (i32, i32) {
    %c0_i32 = arith.constant 0 : i32
    %c0_i32_0 = arith.constant 0 : i32
    return %c0_i32, %arg1 : i32, i32
  }
  func.func @transform_4(%arg0: i32, %arg1: i32, %arg2: i32) -> (i32, i32) {
    %c0_i32 = arith.constant 0 : i32
    return %arg0, %arg1 : i32, i32
  }
}

</mosaic_0001>

<llo_original>
// kernel: _masked_linear_2d.1
$region0: #{_masked_linear_2d.1}
  #allocation0 [shape = 'u32[]', space=smem, size = 0x4, offset = 0x4, fixed_abs, tag = 'smem constant byte address 0x4 - core index']
  #allocation1 [shape = 'u32[144,128]{1,0:T(1,128)}', space=vmem, size = 0x12000, scoped, tag = 'internal scratch']
  %s0 = inlined_call_operand.vmem [shape: f32[8,128], index: 0, kind: input, shape index: {}]
  %s1 = inlined_call_operand.hbm [shape: f32[128,128], index: 1, kind: input, shape index: {}]
  %s2 = inlined_call_operand.hbm [shape: f32[128,128], index: 2, kind: input, shape index: {}]
  %s3 = inlined_call_operand.vmem [shape: f32[1,128], index: 3, kind: input, shape index: {}]
  %s4 = inlined_call_operand.hbm [shape: f32[8,128], index: 4, kind: output, shape index: {}]
  %s5 = sld [smem:[#allocation0]]
  $region46: #{_masked_linear_2d.1} parent=0
    _
  %s7 = ssub.s32 1, %s5
  %s8 = scalar_select 0, %s7, %s5
  $region1: #{_masked_linear_2d.1} parent=0
    #allocation2 [shape = 'u8[65536]{0}', space=vmem, size = 0x10000, scoped, tag = 'input window, operand 1, single buffered']
    #allocation3 [shape = 's32[1]{0}', space=sflag, size = 0x4, scoped, tag = 'scoped memory for _masked_linear_2d.1']
    #allocation4 [shape = 's32[1]{0}', space=sflag, size = 0x4, scoped, tag = 'scoped memory for _masked_linear_2d.1']
    #allocation5 [shape = 'u8[65536]{0}', space=vmem, size = 0x10000, scoped, tag = 'input window, operand 2, single buffered']
    #allocation6 [shape = 's32[1]{0}', space=sflag, size = 0x4, scoped, tag = 'scoped memory for _masked_linear_2d.1']
    #allocation7 [shape = 'u8[4096]{0}', space=vmem, size = 0x1000, scoped, tag = 'output window, operand 0, single buffered']
    %9 = vsyncpa [#allocation3], 0
    %10 = vsyncpa [#allocation6], 0
    %11 = vsyncpa [#allocation4], 0
    // Predicated region
    $region2: #{_masked_linear_2d.1} parent=1 // pred_check
      _
    $region3: #{_masked_linear_2d.1} parent=1 // pred_check_branch
      %13 = sbr.rel (0) target = $region5
    $region4: #{_masked_linear_2d.1} parent=1 // pred_region
      _
    $region5: #{_masked_linear_2d.1} parent=1 // pred_fallthru
      _
    // Predicated region
    $region6: #{_masked_linear_2d.1} parent=1 // pred_check
      _
    $region7: #{_masked_linear_2d.1} parent=1 // pred_check_branch
      %15 = sbr.rel (0) target = $region9
    $region8: #{_masked_linear_2d.1} parent=1 // pred_region
      %s17 = ssub.s32 2048, 2048
      %18 = vsyncadd [#allocation3], %s17
      %s19 = sshll.u32 [#allocation2], 4
      %s20 = int_to_ptr.vmem [resolvable:$true] %s19
      %25 = dma.hbm_to_vmem [thread:$0]  %s1, 2048, %s20, [#allocation3], 128, 128, 8
    $region9: #{_masked_linear_2d.1} parent=1 // pred_fallthru
      _
    // Predicated region
    $region10: #{_masked_linear_2d.1} parent=1 // pred_check
      _
    $region11: #{_masked_linear_2d.1} parent=1 // pred_check_branch
      %27 = sbr.rel (0) target = $region13
    $region12: #{_masked_linear_2d.1} parent=1 // pred_region
      %s29 = ssub.s32 2048, 2048
      %30 = vsyncadd [#allocation6], %s29
      %s31 = sshll.u32 [#allocation5], 4
      %s32 = int_to_ptr.vmem [resolvable:$true] %s31
      %37 = dma.hbm_to_vmem [thread:$0]  %s2, 2048, %s32, [#allocation6], 128, 128, 8
    $region13: #{_masked_linear_2d.1} parent=1 // pred_fallthru
      _
    // Predicated region
    $region14: #{_masked_linear_2d.1} parent=1 // pred_check
      _
    $region15: #{_masked_linear_2d.1} parent=1 // pred_check_branch
      %39 = sbr.rel (0) target = $region17
    $region16: #{_masked_linear_2d.1} parent=1 // pred_region
      _
    $region17: #{_masked_linear_2d.1} parent=1 // pred_fallthru
      _
    // Predicated region
    $region18: #{_masked_linear_2d.1} parent=1 // pred_check
      _
    $region19: #{_masked_linear_2d.1} parent=1 // pred_check_branch
      %41 = sbr.rel (0) target = $region21
    $region20: #{_masked_linear_2d.1} parent=1 // pred_region
      %42 = dma.done [#allocation3], 2048
    $region21: #{_masked_linear_2d.1} parent=1 // pred_fallthru
      _
    // Predicated region
    $region22: #{_masked_linear_2d.1} parent=1 // pred_check
      _
    $region23: #{_masked_linear_2d.1} parent=1 // pred_check_branch
      %44 = sbr.rel (0) target = $region25
    $region24: #{_masked_linear_2d.1} parent=1 // pred_region
      %45 = dma.done [#allocation6], 2048
    $region25: #{_masked_linear_2d.1} parent=1 // pred_fallthru
      _
    %v46 = vld [vmem:[#allocation2] sm:$0xff]
    %v47 = vld [vmem:[#allocation2 + $0x8] sm:$0xff]
    %v48 = vld [vmem:[#allocation2 + $0x10] sm:$0xff]
    %v49 = vld [vmem:[#allocation2 + $0x18] sm:$0xff]
    %v50 = vld [vmem:[#allocation2 + $0x20] sm:$0xff]
    %v51 = vld [vmem:[#allocation2 + $0x28] sm:$0xff]
    %v52 = vld [vmem:[#allocation2 + $0x30] sm:$0xff]
    %v53 = vld [vmem:[#allocation2 + $0x38] sm:$0xff]
    %v54 = vld [vmem:[#allocation2 + $0x40] sm:$0xff]
    %v55 = vld [vmem:[#allocation2 + $0x48] sm:$0xff]
    %v56 = vld [vmem:[#allocation2 + $0x50] sm:$0xff]
    %v57 = vld [vmem:[#allocation2 + $0x58] sm:$0xff]
    %v58 = vld [vmem:[#allocation2 + $0x60] sm:$0xff]
    %v59 = vld [vmem:[#allocation2 + $0x68] sm:$0xff]
    %v60 = vld [vmem:[#allocation2 + $0x70] sm:$0xff]
    %v61 = vld [vmem:[#allocation2 + $0x78] sm:$0xff]
    %v62 = vld [vmem:[#allocation5] sm:$0xff]
    %v63 = vld [vmem:[#allocation5 + $0x8] sm:$0xff]
    %v64 = vld [vmem:[#allocation5 + $0x10] sm:$0xff]
    %v65 = vld [vmem:[#allocation5 + $0x18] sm:$0xff]
    %v66 = vld [vmem:[#allocation5 + $0x20] sm:$0xff]
    %v67 = vld [vmem:[#allocation5 + $0x28] sm:$0xff]
    %v68 = vld [vmem:[#allocation5 + $0x30] sm:$0xff]
    %v69 = vld [vmem:[#allocation5 + $0x38] sm:$0xff]
    %v70 = vld [vmem:[#allocation5 + $0x40] sm:$0xff]
    %v71 = vld [vmem:[#allocation5 + $0x48] sm:$0xff]
    %v72 = vld [vmem:[#allocation5 + $0x50] sm:$0xff]
    %v73 = vld [vmem:[#allocation5 + $0x58] sm:$0xff]
    %v74 = vld [vmem:[#allocation5 + $0x60] sm:$0xff]
    %v75 = vld [vmem:[#allocation5 + $0x68] sm:$0xff]
    %v76 = vld [vmem:[#allocation5 + $0x70] sm:$0xff]
    %v77 = vld [vmem:[#allocation5 + $0x78] sm:$0xff]
    %v78 = vadd.f32 %v46, %v62
    %v79 = vadd.f32 %v47, %v63
    %v80 = vadd.f32 %v48, %v64
    %v81 = vadd.f32 %v49, %v65
    %v82 = vadd.f32 %v50, %v66
    %v83 = vadd.f32 %v51, %v67
    %v84 = vadd.f32 %v52, %v68
    %v85 = vadd.f32 %v53, %v69
    %v86 = vadd.f32 %v54, %v70
    %v87 = vadd.f32 %v55, %v71
    %v88 = vadd.f32 %v56, %v72
    %v89 = vadd.f32 %v57, %v73
    %v90 = vadd.f32 %v58, %v74
    %v91 = vadd.f32 %v59, %v75
    %v92 = vadd.f32 %v60, %v76
    %v93 = vadd.f32 %v61, %v77
    %v94 = vld [vmem:[%s0] sm:$0xff]
    %95 = vmatprep.subr.mxu0 0.0
    %96 = vmatpush1.msra.mxu0 %v78
    %97 = vmatprep.subr.mxu0 0.0
    %98 = vmatpush1.msra.mxu0 %v79
    %99 = vmatprep.subr.mxu0 0.0
    %100 = vmatpush1.msra.mxu0 %v80
    %101 = vmatprep.subr.mxu0 0.0
    %102 = vmatpush1.msra.mxu0 %v81
    %103 = vmatprep.subr.mxu0 0.0
    %104 = vmatpush1.msra.mxu0 %v82
    %105 = vmatprep.subr.mxu0 0.0
    %106 = vmatpush1.msra.mxu0 %v83
    %107 = vmatprep.subr.mxu0 0.0
    %108 = vmatpush1.msra.mxu0 %v84
    %109 = vmatprep.subr.mxu0 0.0
    %110 = vmatpush1.msra.mxu0 %v85
    %111 = vmatprep.subr.mxu0 0.0
    %112 = vmatpush1.msra.mxu0 %v86
    %113 = vmatprep.subr.mxu0 0.0
    %114 = vmatpush1.msra.mxu0 %v87
    %115 = vmatprep.subr.mxu0 0.0
    %116 = vmatpush1.msra.mxu0 %v88
    %117 = vmatprep.subr.mxu0 0.0
    %118 = vmatpush1.msra.mxu0 %v89
    %119 = vmatprep.subr.mxu0 0.0
    %120 = vmatpush1.msra.mxu0 %v90
    %121 = vmatprep.subr.mxu0 0.0
    %122 = vmatpush1.msra.mxu0 %v91
    %123 = vmatprep.subr.mxu0 0.0
    %124 = vmatpush1.msra.mxu0 %v92
    %125 = vmatprep.subr.mxu0 0.0
    %126 = vmatpush1.msra.mxu0 %v93
    %127 = vmatprep.subr.mxu0 0.0
    %128 = vmatpush1.msra.mxu0 0.0
    %129 = vmatprep.subr.mxu0 0.0
    %130 = vmatpush1.msra.mxu0 0.0
    %131 = vmatprep.subr.mxu0 0.0
    %132 = vmatpush1.msra.mxu0 0.0
    %133 = vmatprep.subr.mxu0 0.0
    %134 = vmatpush1.msra.mxu0 0.0
    %135 = vmatprep.subr.mxu0 0.0
    %136 = vmatpush1.msra.mxu0 0.0
    %137 = vmatprep.subr.mxu0 0.0
    %138 = vmatpush1.msra.mxu0 0.0
    %139 = vmatprep.subr.mxu0 0.0
    %140 = vmatpush1.msra.mxu0 0.0
    %141 = vmatprep.subr.mxu0 0.0
    %142 = vmatpush1.msra.mxu0 0.0
    %143 = vmatprep.subr.mxu0 0.0
    %144 = vmatpush1.msra.mxu0 0.0
    %145 = vmatprep.subr.mxu0 0.0
    %146 = vmatpush1.msra.mxu0 0.0
    %147 = vmatprep.subr.mxu0 0.0
    %148 = vmatpush1.msra.mxu0 0.0
    %149 = vmatprep.subr.mxu0 0.0
    %150 = vmatpush1.msra.mxu0 0.0
    %151 = vmatprep.subr.mxu0 0.0
    %152 = vmatpush1.msra.mxu0 0.0
    %153 = vmatprep.subr.mxu0 0.0
    %154 = vmatpush1.msra.mxu0 0.0
    %155 = vmatprep.subr.mxu0 0.0
    %156 = vmatpush1.msra.mxu0 0.0
    %157 = vmatprep.subr.mxu0 0.0
    %158 = vmatpush1.msra.mxu0 0.0
    %159 = vmatprep.mubr.f32.mxu0 0.0
    %160 = vmatmul.mubr.f32.gmra.mrb[0].mxu0 %v94
    %v161 = vpop.f32.mrb[0].mxu0
    %v162 = vadd.f32 0.0, %v161
    %v163 = vpop.f32.mrb[0].mxu0
    %164 = vdwg.mxu0
    %p165 = scmp.eq.s32.totalorder 0, 0
    // Predicated region
    $region26: #{_masked_linear_2d.1} parent=1 // pred_check
      %p166 = pneg %p165
    $region27: #{_masked_linear_2d.1} parent=1 // pred_check_branch
      %168 = sbr.rel (%p166) target = $region29
    $region28: #{_masked_linear_2d.1} parent=1 // pred_region
      %169 = vst [vmem:[#allocation7] sm:$0xff] %v162
    $region29: #{_masked_linear_2d.1} parent=1 // pred_fallthru
      _
    %p170 = scmp.gt.s32.totalorder 0, 0
    // Predicated region
    $region30: #{_masked_linear_2d.1} parent=1 // pred_check
      %p171 = pneg %p170
    $region31: #{_masked_linear_2d.1} parent=1 // pred_check_branch
      %173 = sbr.rel (%p171) target = $region33
    $region32: #{_masked_linear_2d.1} parent=1 // pred_region
      %v174 = vld [vmem:[#allocation7] sm:$0xff]
      %v175 = vadd.f32 %v174, %v162
      %176 = vst [vmem:[#allocation7] sm:$0xff] %v175
    $region33: #{_masked_linear_2d.1} parent=1 // pred_fallthru
      _
    // Predicated region
    $region34: #{_masked_linear_2d.1} parent=1 // pred_check
      %p177 = pneg %p165
    $region35: #{_masked_linear_2d.1} parent=1 // pred_check_branch
      %179 = sbr.rel (%p177) target = $region37
    $region36: #{_masked_linear_2d.1} parent=1 // pred_region
      %v180 = vld [vmem:[#allocation7] sm:$0xff]
      %v181 = vld [vmem:[%s3] sm:$0x1]
      %v183 = vlaneseq
      %v184 = vshrl.u32 %v183, 7
      %v185 = vsub.s32 0, %v184
      %v186 = vrot.slane %v181, %v185
      %v188 = vadd.f32 %v180, %v186
      %189 = vst [vmem:[#allocation7] sm:$0xff] %v188
    $region37: #{_masked_linear_2d.1} parent=1 // pred_fallthru
      _
    // Predicated region
    $region38: #{_masked_linear_2d.1} parent=1 // pred_check
      _
    $region39: #{_masked_linear_2d.1} parent=1 // pred_check_branch
      %191 = sbr.rel (0) target = $region41
    $region40: #{_masked_linear_2d.1} parent=1 // pred_region
      %s193 = ssub.s32 128, 128
      %194 = vsyncadd [#allocation4], %s193
      %s196 = sshll.u32 [#allocation7], 4
      %s197 = int_to_ptr.vmem [resolvable:$true] %s196
      %199 = dma.vmem_to_hbm [thread:$0]  %s197, 128, %s4, [#allocation4]
    $region41: #{_masked_linear_2d.1} parent=1 // pred_fallthru
      _
    // Predicated region
    $region42: #{_masked_linear_2d.1} parent=1 // pred_check
      _
    $region43: #{_masked_linear_2d.1} parent=1 // pred_check_branch
      %201 = sbr.rel (0) target = $region45
    $region44: #{_masked_linear_2d.1} parent=1 // pred_region
      %202 = dma.done [#allocation4], 128
    $region45: #{_masked_linear_2d.1} parent=1 // pred_fallthru
      _
    %203 = vsyncpa [#allocation3], 1
    %204 = vsyncpa [#allocation6], 1
    %205 = vsyncpa [#allocation4], 1

</llo_original>
